<compile_context>
chip_gen: v6e
topology: v6e:2x2x1
jax: 0.10.0
libtpu: 0.0.40
codegen_flags: <defaults>
</compile_context>

<pallas_src>
import math

import jax
import jax.numpy as jnp
from jax.experimental import pallas as pl
from jax.experimental.pallas import tpu as pltpu


def _round_up(x, m):
    return ((x + m - 1) // m) * m


def _linear_kernel(x_ref, wt_ref, b_ref, o_ref, acc_ref):
    # x_ref:  (TB, TK)     VMEM, f32 or bf16 state tile
    # wt_ref: (TK, A_pad)  VMEM weight tile (pre-transposed, lane-padded)
    # b_ref:  (1, A_pad)   VMEM-resident f32 bias (constant index_map)
    # o_ref:  (TB, A_pad)  VMEM f32 output tile, lane-dense (A_pad % 128 == 0)
    # acc_ref:(TB, A_pad)  f32 accumulator scratch (lives across the K axis)
    k = pl.program_id(1)

    @pl.when(k == 0)
    def _init():
        acc_ref[...] = jnp.zeros_like(acc_ref)

    x = x_ref[...]
    if x.dtype != wt_ref.dtype:
        # Free VPU cast (mem-bound kernel); avoids a separate XLA cast pass.
        x = x.astype(wt_ref.dtype)
    acc_ref[...] += jnp.dot(x, wt_ref[...], preferred_element_type=jnp.float32)

    @pl.when(k == pl.num_programs(1) - 1)
    def _finalize():
        o_ref[...] = (acc_ref[...] + b_ref[...]).astype(o_ref.dtype)


def _pick_tiles(B, F, A_pad, x_esize, w_esize, *,
                vmem_budget_bytes, tb_max, tk_target):
    """Pick (tb, tk) so the working set fits the VMEM budget on all gens."""
    # --- K (reduction) tile: largest multiple of 128 that divides F and is
    # <= tk_target (no partial K blocks -> accumulator never sees OOB data);
    # otherwise fall back to a single full-F block.
    if F % 128 == 0 and F > tk_target:
        tk = 128
        cand = (tk_target // 128) * 128
        while cand >= 128:
            if F % cand == 0:
                tk = cand
                break
            cand -= 128
    else:
        # TODO(synk): F not a multiple of 128 and too large for VMEM would
        # need in-kernel K masking; fall back to a single K block here.
        tk = F

    # --- Batch tile, from the VMEM budget:
    #   2x x-block (tb*tk*x_esize)  [double-buffered]
    #   2x weight block (tk*A_pad*w_esize)
    #   2x out block (tb*A_pad*4) + 1x f32 accumulator (tb*A_pad*4) + bias
    sub = 16 if x_esize == 2 else 8           # sublane multiple (bf16 vs f32)
    fixed = 2 * tk * A_pad * w_esize + 2 * A_pad * 4
    per_row = 2 * tk * x_esize + 3 * A_pad * 4
    tb_fit = (vmem_budget_bytes - fixed) // per_row
    tb_fit = max(sub, (tb_fit // sub) * sub)

    if B <= sub:
        tb = B                                 # block == full batch dim
    else:
        # >= 2 batch tiles whenever possible: shards the "parallel" axis
        # across v7x's two TensorCores and keeps the DMA pipeline >1 deep.
        half = _round_up(-(-B // 2), sub)      # round_up(cdiv(B, 2), sublane)
        tb = max(sub, min(tb_max, tb_fit, half))
    return tb, tk


def lrqnet_forward(state, weight_t, bias_pad, *, num_actions=None,
                   tb_max=1024, tk_target=4096,
                   vmem_budget_bytes=40 * 1024 * 1024,
                   return_padded=False):
    """Pallas equivalent of LRQNet.forward: q = state @ W.T + b.

    state:     (B, F)      f32 or bf16 (F = prod(state_shape))
    weight_t:  (F, A_pad)  pre-transposed, lane-padded nn.Linear weight
    bias_pad:  (A_pad,)    f32, zero-padded bias
    Returns (B, num_actions) f32, or the padded (B, A_pad) if return_padded.
    """
    B, F = state.shape
    Fw, A_pad = weight_t.shape
    assert Fw == F, "weight_t must be (F, A_pad)"
    assert A_pad % 128 == 0, "weight_t must be lane-padded to a multiple of 128"
    bias2d = bias_pad.reshape(1, A_pad).astype(jnp.float32)

    x_esize = jnp.dtype(state.dtype).itemsize
    w_esize = jnp.dtype(weight_t.dtype).itemsize
    tb, tk = _pick_tiles(B, F, A_pad, x_esize, w_esize,
                         vmem_budget_bytes=vmem_budget_bytes,
                         tb_max=tb_max, tk_target=tk_target)
    grid_b = pl.cdiv(B, tb)
    grid_k = pl.cdiv(F, tk)   # exact when tk < F (tk divides F by construction)

    out = pl.pallas_call(
        _linear_kernel,
        out_shape=jax.ShapeDtypeStruct((B, A_pad), jnp.float32),
        grid_spec=pltpu.PrefetchScalarGridSpec(
            num_scalar_prefetch=0,
            grid=(grid_b, grid_k),
            in_specs=[
                # Activations: one (tb, tk) tile per grid step (pipelined).
                pl.BlockSpec((tb, tk), lambda i, k: (i, k)),
                # Weight: K-tiled; constant over the batch axis.
                pl.BlockSpec((tk, A_pad), lambda i, k: (k, 0)),
                # Bias: tiny VMEM-resident block (constant index_map).
                pl.BlockSpec((1, A_pad), lambda i, k: (0, 0)),
            ],
            out_specs=pl.BlockSpec((tb, A_pad), lambda i, k: (i, 0)),
            scratch_shapes=[pltpu.VMEM((tb, A_pad), jnp.float32)],
        ),
        compiler_params=pltpu.CompilerParams(
            # Batch axis independent -> shard across TCs; K axis is a
            # sequential reduction.
            dimension_semantics=("parallel", "arbitrary"),
            vmem_limit_bytes=64 * 1024 * 1024,
        ),
    )(state, weight_t, bias2d)

    if return_padded or num_actions is None or num_actions == A_pad:
        return out
    return out[:, :num_actions]


def init_lrqnet_params(key, state_shape, num_actions, *,
                       lane_pad=128, param_dtype=jnp.bfloat16):
    """nn.Linear-style init, stored once in kernel-native layout.

    Returns:
      weight   (A, F)      f32, torch nn.Linear layout (reference checks)
      bias     (A,)        f32
      weight_t (F, A_pad)  param_dtype (bf16 default), transposed + lane-padded
      bias_pad (A_pad,)    f32, zero-padded
    """
    flat = 1
    for d in state_shape:
        flat *= d
    bound = 1.0 / math.sqrt(flat)
    kw, kb = jax.random.split(key)
    weight = jax.random.uniform(kw, (num_actions, flat), jnp.float32,
                                minval=-bound, maxval=bound)
    bias = jax.random.uniform(kb, (num_actions,), jnp.float32,
                              minval=-bound, maxval=bound)

    a_pad = max(lane_pad, _round_up(num_actions, lane_pad))
    weight_t = (jnp.zeros((flat, a_pad), param_dtype)
                .at[:, :num_actions].set(weight.T.astype(param_dtype)))
    bias_pad = jnp.zeros((a_pad,), jnp.float32).at[:num_actions].set(bias)
    return weight, bias, weight_t, bias_pad


if __name__ == "__main__":
    key = jax.random.PRNGKey(0)
    k_param, k_state = jax.random.split(key)

    # Module-consistent small shapes: state_shape=(4,16,16) -> F=1024, A=16.
    state_shape = (4, 16, 16)
    num_actions = 16
    batch = 2
    flat = 4 * 16 * 16

    state = jax.random.normal(k_state, (batch, flat), jnp.float32)

    # f32 params: exact check vs. plain-JAX nn.Linear reference.
    weight, bias, weight_t_f32, bias_pad_f32 = init_lrqnet_params(
        k_param, state_shape, num_actions, param_dtype=jnp.float32)
    ref = state @ weight.T + bias

    q_f32 = lrqnet_forward(state, weight_t_f32, bias_pad_f32,
                           num_actions=num_actions)
    q_f32 = jax.block_until_ready(q_f32)
    assert q_f32.shape == (batch, num_actions)
    assert jnp.allclose(q_f32, ref, atol=1e-5, rtol=1e-5)

    # Default bf16-operand path (f32 MXU accumulation + f32 bias epilogue).
    _, _, weight_t_bf16, bias_pad_bf16 = init_lrqnet_params(
        k_param, state_shape, num_actions)  # param_dtype defaults to bf16
    q_bf16 = lrqnet_forward(state.astype(jnp.bfloat16), weight_t_bf16,
                            bias_pad_bf16, num_actions=num_actions)
    q_bf16 = jax.block_until_ready(q_bf16)
    # NOTE: bf16 tolerance calibrated for F=1024; error grows ~sqrt(F).
    assert jnp.allclose(q_bf16, ref, atol=1e-1, rtol=5e-2)

    # Mixed path: f32 state + bf16 weights (in-kernel cast, no wrapper cast).
    q_mixed = lrqnet_forward(state, weight_t_bf16, bias_pad_bf16,
                             num_actions=num_actions)
    q_mixed = jax.block_until_ready(q_mixed)
    assert jnp.allclose(q_mixed, ref, atol=1e-1, rtol=5e-2)

    # Larger batch: exercises the >=2-batch-tile grid (parallel axis).
    big_state = jax.random.normal(k_state, (64, flat), jnp.float32)
    big_ref = big_state @ weight.T + bias
    q_big = lrqnet_forward(big_state, weight_t_f32, bias_pad_f32,
                           num_actions=num_actions)
    q_big = jax.block_until_ready(q_big)
    assert jnp.allclose(q_big, big_ref, atol=1e-4, rtol=1e-5)

    # Explicitly exercise the K-tiled (reduction-axis) accumulator path.
    q_ktile = lrqnet_forward(big_state, weight_t_f32, bias_pad_f32,
                             num_actions=num_actions, tk_target=256)
    q_ktile = jax.block_until_ready(q_ktile)
    assert jnp.allclose(q_ktile, big_ref, atol=1e-4, rtol=1e-5)

    print("KERNEL_OK")
</pallas_src>

<mosaic_0001>
module attributes {stable_mosaic.version = 11 : i64} {
  func.func @_linear_kernel(%arg0: i32, %arg1: i32, %arg2: memref<2x1024xf32, #tpu.memory_space<vmem>>, %arg3: memref<1024x128xf32, #tpu.memory_space<vmem>>, %arg4: memref<1x128xf32, #tpu.memory_space<vmem>>, %arg5: memref<2x128xf32, #tpu.memory_space<vmem>>, %arg6: memref<2x128xf32, #tpu.memory_space<vmem>>) attributes {dimension_semantics = [#tpu.dimension_semantics<parallel>, #tpu.dimension_semantics<arbitrary>], iteration_bounds = array<i64: 1, 1>, scalar_prefetch = 0 : i64, scratch_operands = 1 : i64, tpu.core_type = #tpu.core_type<tc>, window_params = [{transform_indices = @transform_0, window_bounds = array<i64: 2, 1024>}, {transform_indices = @transform_1, window_bounds = array<i64: 1024, 128>}, {pipeline_mode = #tpu.pipeline_mode<synchronous>, transform_indices = @transform_2, window_bounds = array<i64: 1, 128>}, {transform_indices = @transform_3, window_bounds = array<i64: 2, 128>}]} {
    %c0_i32 = arith.constant 0 : i32
    %0 = arith.cmpi eq, %arg1, %c0_i32 : i32
    %1 = arith.extui %0 : i1 to i32
    %c0_i32_0 = arith.constant 0 : i32
    %2 = arith.cmpi ne, %1, %c0_i32_0 : i32
    scf.if %2 {
      %cst_10 = arith.constant 0.000000e+00 : f32
      %12 = vector.broadcast %cst_10 : f32 to vector<2x128xf32>
      %c0_11 = arith.constant 0 : index
      %c0_12 = arith.constant 0 : index
      %13 = vector.load %arg6[%c0_11, %c0_12] : memref<2x128xf32, #tpu.memory_space<vmem>>, vector<2x128xf32>
      tpu.vector_store %arg6[%c0_11, %c0_12], %12 {strides = array<i32>} : memref<2x128xf32, #tpu.memory_space<vmem>>, vector<2x128xf32>,
    } else {
    }
    %c0 = arith.constant 0 : index
    %c0_1 = arith.constant 0 : index
    %3 = vector.load %arg2[%c0, %c0_1] : memref<2x1024xf32, #tpu.memory_space<vmem>>, vector<2x1024xf32>
    %c0_2 = arith.constant 0 : index
    %c0_3 = arith.constant 0 : index
    %4 = vector.load %arg6[%c0_2, %c0_3] : memref<2x128xf32, #tpu.memory_space<vmem>>, vector<2x128xf32>
    %c0_4 = arith.constant 0 : index
    %c0_5 = arith.constant 0 : index
    %5 = vector.load %arg3[%c0_4, %c0_5] : memref<1024x128xf32, #tpu.memory_space<vmem>>, vector<1024x128xf32>
    %cst = arith.constant dense<0.000000e+00> : vector<2x128xf32>
    %6 = tpu.matmul %3, %5, %cst {dimension_numbers = #tpu.dot_dimension_numbers<[1], [0], [0], [1], [0, 0, 1, 1], [], []>} : vector<2x1024xf32>, vector<1024x128xf32>, vector<2x128xf32> -> vector<2x128xf32>
    %7 = arith.addf %4, %6 : vector<2x128xf32>
    %c0_6 = arith.constant 0 : index
    %c0_7 = arith.constant 0 : index
    %8 = vector.load %arg6[%c0_6, %c0_7] : memref<2x128xf32, #tpu.memory_space<vmem>>, vector<2x128xf32>
    tpu.vector_store %arg6[%c0_6, %c0_7], %7 {strides = array<i32>} : memref<2x128xf32, #tpu.memory_space<vmem>>, vector<2x128xf32>,
    %c0_i32_8 = arith.constant 0 : i32
    %9 = arith.cmpi eq, %arg1, %c0_i32_8 : i32
    %10 = arith.extui %9 : i1 to i32
    %c0_i32_9 = arith.constant 0 : i32
    %11 = arith.cmpi ne, %10, %c0_i32_9 : i32
    scf.if %11 {
      %c0_10 = arith.constant 0 : index
      %c0_11 = arith.constant 0 : index
      %12 = vector.load %arg6[%c0_10, %c0_11] : memref<2x128xf32, #tpu.memory_space<vmem>>, vector<2x128xf32>
      %c0_12 = arith.constant 0 : index
      %c0_13 = arith.constant 0 : index
      %13 = vector.load %arg4[%c0_12, %c0_13] : memref<1x128xf32, #tpu.memory_space<vmem>>, vector<1x128xf32>
      %14 = vector.broadcast %13 : vector<1x128xf32> to vector<2x128xf32>
      %15 = arith.addf %12, %14 : vector<2x128xf32>
      %c0_14 = arith.constant 0 : index
      %c0_15 = arith.constant 0 : index
      %16 = vector.load %arg5[%c0_14, %c0_15] : memref<2x128xf32, #tpu.memory_space<vmem>>, vector<2x128xf32>
      tpu.vector_store %arg5[%c0_14, %c0_15], %15 {strides = array<i32>} : memref<2x128xf32, #tpu.memory_space<vmem>>, vector<2x128xf32>,
    } else {
    }
    return
  }
  func.func @transform_0(%arg0: i32, %arg1: i32) -> (i32, i32) {
    %c0_i32 = arith.constant 0 : i32
    return %arg0, %arg1 : i32, i32
  }
  func.func @transform_1(%arg0: i32, %arg1: i32) -> (i32, i32) {
    %c0_i32 = arith.constant 0 : i32
    %c0_i32_0 = arith.constant 0 : i32
    return %arg1, %c0_i32 : i32, i32
  }
  func.func @transform_2(%arg0: i32, %arg1: i32) -> (i32, i32) {
    %c0_i32 = arith.constant 0 : i32
    %c0_i32_0 = arith.constant 0 : i32
    %c0_i32_1 = arith.constant 0 : i32
    return %c0_i32, %c0_i32_0 : i32, i32
  }
  func.func @transform_3(%arg0: i32, %arg1: i32) -> (i32, i32) {
    %c0_i32 = arith.constant 0 : i32
    %c0_i32_0 = arith.constant 0 : i32
    return %arg0, %c0_i32 : i32, i32
  }
}

</mosaic_0001>

<llo_original>
// kernel: tpu_custom_call.1
$region0: #{tpu_custom_call.1}
  #allocation0 [shape = 'u32[]', space=smem, size = 0x4, offset = 0x4, fixed_abs, tag = 'smem constant byte address 0x4 - core index']
  #allocation1 [shape = 'u32[144,128]{1,0:T(1,128)}', space=vmem, size = 0x12000, scoped, tag = 'internal scratch']
  #allocation2 [shape = 'f32[2,128]{1,0:T(2,128)}', space=vmem, size = 0x400, scoped, tag = 'scratch operand']
  %s0 = inlined_call_operand.hbm [shape: f32[2,1024], index: 0, kind: input, shape index: {}]
  %s1 = inlined_call_operand.hbm [shape: f32[1024,128], index: 1, kind: input, shape index: {}]
  %s2 = inlined_call_operand.vmem [shape: f32[1,128], index: 2, kind: input, shape index: {}]
  %s3 = inlined_call_operand.hbm [shape: f32[2,128], index: 3, kind: output, shape index: {}]
  %s4 = sld [smem:[#allocation0]]
  $region38: #{tpu_custom_call.1} parent=0
    _
  %s6 = ssub.s32 1, %s4
  %s7 = scalar_select 0, %s6, %s4
  $region1: #{tpu_custom_call.1} parent=0
    #allocation3 [shape = 'u8[8192]{0}', space=vmem, size = 0x2000, scoped, tag = 'input window, operand 0, single buffered']
    #allocation4 [shape = 's32[1]{0}', space=sflag, size = 0x4, scoped, tag = 'scoped memory for tpu_custom_call.1']
    #allocation5 [shape = 's32[1]{0}', space=sflag, size = 0x4, scoped, tag = 'scoped memory for tpu_custom_call.1']
    #allocation6 [shape = 'u8[524288]{0}', space=vmem, size = 0x80000, scoped, tag = 'input window, operand 1, single buffered']
    #allocation7 [shape = 's32[1]{0}', space=sflag, size = 0x4, scoped, tag = 'scoped memory for tpu_custom_call.1']
    #allocation8 [shape = 'u8[1024]{0}', space=vmem, size = 0x400, scoped, tag = 'output window, operand 0, single buffered']
    %8 = vsyncpa [#allocation4], 0
    %9 = vsyncpa [#allocation7], 0
    %10 = vsyncpa [#allocation5], 0
    // Predicated region
    $region2: #{tpu_custom_call.1} parent=1 // pred_check
      _
    $region3: #{tpu_custom_call.1} parent=1 // pred_check_branch
      %12 = sbr.rel (0) target = $region5
    $region4: #{tpu_custom_call.1} parent=1 // pred_region
      %s14 = ssub.s32 256, 256
      %15 = vsyncadd [#allocation4], %s14
      %s17 = sshll.u32 [#allocation3], 4
      %s18 = int_to_ptr.vmem [resolvable:$true] %s17
      %20 = dma.hbm_to_vmem [thread:$0]  %s0, 256, %s18, [#allocation4]
    $region5: #{tpu_custom_call.1} parent=1 // pred_fallthru
      _
    // Predicated region
    $region6: #{tpu_custom_call.1} parent=1 // pred_check
      _
    $region7: #{tpu_custom_call.1} parent=1 // pred_check_branch
      %22 = sbr.rel (0) target = $region9
    $region8: #{tpu_custom_call.1} parent=1 // pred_region
      %s24 = ssub.s32 16384, 16384
      %25 = vsyncadd [#allocation7], %s24
      %s26 = sshll.u32 [#allocation6], 4
      %s27 = int_to_ptr.vmem [resolvable:$true] %s26
      %32 = dma.hbm_to_vmem [thread:$0]  %s1, 16384, %s27, [#allocation7], 128, 128, 8
    $region9: #{tpu_custom_call.1} parent=1 // pred_fallthru
      _
    // Predicated region
    $region10: #{tpu_custom_call.1} parent=1 // pred_check
      _
    $region11: #{tpu_custom_call.1} parent=1 // pred_check_branch
      %34 = sbr.rel (0) target = $region13
    $region12: #{tpu_custom_call.1} parent=1 // pred_region
      _
    $region13: #{tpu_custom_call.1} parent=1 // pred_fallthru
      _
    // Predicated region
    $region14: #{tpu_custom_call.1} parent=1 // pred_check
      _
    $region15: #{tpu_custom_call.1} parent=1 // pred_check_branch
      %36 = sbr.rel (0) target = $region17
    $region16: #{tpu_custom_call.1} parent=1 // pred_region
      %37 = dma.done [#allocation4], 256
    $region17: #{tpu_custom_call.1} parent=1 // pred_fallthru
      _
    // Predicated region
    $region18: #{tpu_custom_call.1} parent=1 // pred_check
      _
    $region19: #{tpu_custom_call.1} parent=1 // pred_check_branch
      %39 = sbr.rel (0) target = $region21
    $region20: #{tpu_custom_call.1} parent=1 // pred_region
      %40 = dma.done [#allocation7], 16384
    $region21: #{tpu_custom_call.1} parent=1 // pred_fallthru
      _
    %p41 = scmp.eq.s32.totalorder 0, 0
    // Predicated region
    $region22: #{tpu_custom_call.1} parent=1 // pred_check
      %p42 = pneg %p41
    $region23: #{tpu_custom_call.1} parent=1 // pred_check_branch
      %44 = sbr.rel (%p42) target = $region25
    $region24: #{tpu_custom_call.1} parent=1 // pred_region
      %45 = vst [vmem:[#allocation2] sm:$0x3] 0.0
    $region25: #{tpu_custom_call.1} parent=1 // pred_fallthru
      _
    %v46 = vld [vmem:[#allocation3] sm:$0xff]
    %v47 = vld [vmem:[#allocation3 + $0x8] sm:$0xff]
    %v48 = vld [vmem:[#allocation2] sm:$0x3]
    %v49 = vld [vmem:[#allocation6] sm:$0xff]
    %v50 = vld [vmem:[#allocation6 + $0x8] sm:$0xff]
    %v51 = vld [vmem:[#allocation6 + $0x10] sm:$0xff]
    %v52 = vld [vmem:[#allocation6 + $0x18] sm:$0xff]
    %v53 = vld [vmem:[#allocation6 + $0x20] sm:$0xff]
    %v54 = vld [vmem:[#allocation6 + $0x28] sm:$0xff]
    %v55 = vld [vmem:[#allocation6 + $0x30] sm:$0xff]
    %v56 = vld [vmem:[#allocation6 + $0x38] sm:$0xff]
    %v57 = vld [vmem:[#allocation6 + $0x40] sm:$0xff]
    %v58 = vld [vmem:[#allocation6 + $0x48] sm:$0xff]
    %v59 = vld [vmem:[#allocation6 + $0x50] sm:$0xff]
    %v60 = vld [vmem:[#allocation6 + $0x58] sm:$0xff]
    %v61 = vld [vmem:[#allocation6 + $0x60] sm:$0xff]
    %v62 = vld [vmem:[#allocation6 + $0x68] sm:$0xff]
    %v63 = vld [vmem:[#allocation6 + $0x70] sm:$0xff]
    %v64 = vld [vmem:[#allocation6 + $0x78] sm:$0xff]
    %v65 = vld [vmem:[#allocation6 + $0x80] sm:$0xff]
    %v66 = vld [vmem:[#allocation6 + $0x88] sm:$0xff]
    %v67 = vld [vmem:[#allocation6 + $0x90] sm:$0xff]
    %v68 = vld [vmem:[#allocation6 + $0x98] sm:$0xff]
    %v69 = vld [vmem:[#allocation6 + $0xa0] sm:$0xff]
    %v70 = vld [vmem:[#allocation6 + $0xa8] sm:$0xff]
    %v71 = vld [vmem:[#allocation6 + $0xb0] sm:$0xff]
    %v72 = vld [vmem:[#allocation6 + $0xb8] sm:$0xff]
    %v73 = vld [vmem:[#allocation6 + $0xc0] sm:$0xff]
    %v74 = vld [vmem:[#allocation6 + $0xc8] sm:$0xff]
    %v75 = vld [vmem:[#allocation6 + $0xd0] sm:$0xff]
    %v76 = vld [vmem:[#allocation6 + $0xd8] sm:$0xff]
    %v77 = vld [vmem:[#allocation6 + $0xe0] sm:$0xff]
    %v78 = vld [vmem:[#allocation6 + $0xe8] sm:$0xff]
    %v79 = vld [vmem:[#allocation6 + $0xf0] sm:$0xff]
    %v80 = vld [vmem:[#allocation6 + $0xf8] sm:$0xff]
    %v81 = vld [vmem:[#allocation6 + $0x100] sm:$0xff]
    %v82 = vld [vmem:[#allocation6 + $0x108] sm:$0xff]
    %v83 = vld [vmem:[#allocation6 + $0x110] sm:$0xff]
    %v84 = vld [vmem:[#allocation6 + $0x118] sm:$0xff]
    %v85 = vld [vmem:[#allocation6 + $0x120] sm:$0xff]
    %v86 = vld [vmem:[#allocation6 + $0x128] sm:$0xff]
    %v87 = vld [vmem:[#allocation6 + $0x130] sm:$0xff]
    %v88 = vld [vmem:[#allocation6 + $0x138] sm:$0xff]
    %v89 = vld [vmem:[#allocation6 + $0x140] sm:$0xff]
    %v90 = vld [vmem:[#allocation6 + $0x148] sm:$0xff]
    %v91 = vld [vmem:[#allocation6 + $0x150] sm:$0xff]
    %v92 = vld [vmem:[#allocation6 + $0x158] sm:$0xff]
    %v93 = vld [vmem:[#allocation6 + $0x160] sm:$0xff]
    %v94 = vld [vmem:[#allocation6 + $0x168] sm:$0xff]
    %v95 = vld [vmem:[#allocation6 + $0x170] sm:$0xff]
    %v96 = vld [vmem:[#allocation6 + $0x178] sm:$0xff]
    %v97 = vld [vmem:[#allocation6 + $0x180] sm:$0xff]
    %v98 = vld [vmem:[#allocation6 + $0x188] sm:$0xff]
    %v99 = vld [vmem:[#allocation6 + $0x190] sm:$0xff]
    %v100 = vld [vmem:[#allocation6 + $0x198] sm:$0xff]
    %v101 = vld [vmem:[#allocation6 + $0x1a0] sm:$0xff]
    %v102 = vld [vmem:[#allocation6 + $0x1a8] sm:$0xff]
    %v103 = vld [vmem:[#allocation6 + $0x1b0] sm:$0xff]
    %v104 = vld [vmem:[#allocation6 + $0x1b8] sm:$0xff]
    %v105 = vld [vmem:[#allocation6 + $0x1c0] sm:$0xff]
    %v106 = vld [vmem:[#allocation6 + $0x1c8] sm:$0xff]
    %v107 = vld [vmem:[#allocation6 + $0x1d0] sm:$0xff]
    %v108 = vld [vmem:[#allocation6 + $0x1d8] sm:$0xff]
    %v109 = vld [vmem:[#allocation6 + $0x1e0] sm:$0xff]
    %v110 = vld [vmem:[#allocation6 + $0x1e8] sm:$0xff]
    %v111 = vld [vmem:[#allocation6 + $0x1f0] sm:$0xff]
    %v112 = vld [vmem:[#allocation6 + $0x1f8] sm:$0xff]
    %v113 = vld [vmem:[#allocation6 + $0x200] sm:$0xff]
    %v114 = vld [vmem:[#allocation6 + $0x208] sm:$0xff]
    %v115 = vld [vmem:[#allocation6 + $0x210] sm:$0xff]
    %v116 = vld [vmem:[#allocation6 + $0x218] sm:$0xff]
    %v117 = vld [vmem:[#allocation6 + $0x220] sm:$0xff]
    %v118 = vld [vmem:[#allocation6 + $0x228] sm:$0xff]
    %v119 = vld [vmem:[#allocation6 + $0x230] sm:$0xff]
    %v120 = vld [vmem:[#allocation6 + $0x238] sm:$0xff]
    %v121 = vld [vmem:[#allocation6 + $0x240] sm:$0xff]
    %v122 = vld [vmem:[#allocation6 + $0x248] sm:$0xff]
    %v123 = vld [vmem:[#allocation6 + $0x250] sm:$0xff]
    %v124 = vld [vmem:[#allocation6 + $0x258] sm:$0xff]
    %v125 = vld [vmem:[#allocation6 + $0x260] sm:$0xff]
    %v126 = vld [vmem:[#allocation6 + $0x268] sm:$0xff]
    %v127 = vld [vmem:[#allocation6 + $0x270] sm:$0xff]
    %v128 = vld [vmem:[#allocation6 + $0x278] sm:$0xff]
    %v129 = vld [vmem:[#allocation6 + $0x280] sm:$0xff]
    %v130 = vld [vmem:[#allocation6 + $0x288] sm:$0xff]
    %v131 = vld [vmem:[#allocation6 + $0x290] sm:$0xff]
    %v132 = vld [vmem:[#allocation6 + $0x298] sm:$0xff]
    %v133 = vld [vmem:[#allocation6 + $0x2a0] sm:$0xff]
    %v134 = vld [vmem:[#allocation6 + $0x2a8] sm:$0xff]
    %v135 = vld [vmem:[#allocation6 + $0x2b0] sm:$0xff]
    %v136 = vld [vmem:[#allocation6 + $0x2b8] sm:$0xff]
    %v137 = vld [vmem:[#allocation6 + $0x2c0] sm:$0xff]
    %v138 = vld [vmem:[#allocation6 + $0x2c8] sm:$0xff]
    %v139 = vld [vmem:[#allocation6 + $0x2d0] sm:$0xff]
    %v140 = vld [vmem:[#allocation6 + $0x2d8] sm:$0xff]
    %v141 = vld [vmem:[#allocation6 + $0x2e0] sm:$0xff]
    %v142 = vld [vmem:[#allocation6 + $0x2e8] sm:$0xff]
    %v143 = vld [vmem:[#allocation6 + $0x2f0] sm:$0xff]
    %v144 = vld [vmem:[#allocation6 + $0x2f8] sm:$0xff]
    %v145 = vld [vmem:[#allocation6 + $0x300] sm:$0xff]
    %v146 = vld [vmem:[#allocation6 + $0x308] sm:$0xff]
    %v147 = vld [vmem:[#allocation6 + $0x310] sm:$0xff]
    %v148 = vld [vmem:[#allocation6 + $0x318] sm:$0xff]
    %v149 = vld [vmem:[#allocation6 + $0x320] sm:$0xff]
    %v150 = vld [vmem:[#allocation6 + $0x328] sm:$0xff]
    %v151 = vld [vmem:[#allocation6 + $0x330] sm:$0xff]
    %v152 = vld [vmem:[#allocation6 + $0x338] sm:$0xff]
    %v153 = vld [vmem:[#allocation6 + $0x340] sm:$0xff]
    %v154 = vld [vmem:[#allocation6 + $0x348] sm:$0xff]
    %v155 = vld [vmem:[#allocation6 + $0x350] sm:$0xff]
    %v156 = vld [vmem:[#allocation6 + $0x358] sm:$0xff]
    %v157 = vld [vmem:[#allocation6 + $0x360] sm:$0xff]
    %v158 = vld [vmem:[#allocation6 + $0x368] sm:$0xff]
    %v159 = vld [vmem:[#allocation6 + $0x370] sm:$0xff]
    %v160 = vld [vmem:[#allocation6 + $0x378] sm:$0xff]
    %v161 = vld [vmem:[#allocation6 + $0x380] sm:$0xff]
    %v162 = vld [vmem:[#allocation6 + $0x388] sm:$0xff]
    %v163 = vld [vmem:[#allocation6 + $0x390] sm:$0xff]
    %v164 = vld [vmem:[#allocation6 + $0x398] sm:$0xff]
    %v165 = vld [vmem:[#allocation6 + $0x3a0] sm:$0xff]
    %v166 = vld [vmem:[#allocation6 + $0x3a8] sm:$0xff]
    %v167 = vld [vmem:[#allocation6 + $0x3b0] sm:$0xff]
    %v168 = vld [vmem:[#allocation6 + $0x3b8] sm:$0xff]
    %v169 = vld [vmem:[#allocation6 + $0x3c0] sm:$0xff]
    %v170 = vld [vmem:[#allocation6 + $0x3c8] sm:$0xff]
    %v171 = vld [vmem:[#allocation6 + $0x3d0] sm:$0xff]
    %v172 = vld [vmem:[#allocation6 + $0x3d8] sm:$0xff]
    %v173 = vld [vmem:[#allocation6 + $0x3e0] sm:$0xff]
    %v174 = vld [vmem:[#allocation6 + $0x3e8] sm:$0xff]
    %v175 = vld [vmem:[#allocation6 + $0x3f0] sm:$0xff]
    %v176 = vld [vmem:[#allocation6 + $0x3f8] sm:$0xff]
    %v179 = vcombine.high %v46, %v46
    %v181 = vunpack.c.l.s4 1983009808
    %v182 = vunpack.c.0.s8 %v181
    %v183 = vlaneseq
    %v184 = vshrl.u32 %v183, 7
    %v185 = vsub.s32 %v182, %v184
    %v186 = vrot.slane %v46, %v185
    %v188 = vunpack.c.l.s4 1983009808
    %v189 = vunpack.c.0.s8 %v188
    %v190 = vlaneseq
    %v191 = vshrl.u32 %v190, 7
    %v192 = vsub.s32 %v189, %v191
    %v193 = vrot.slane %v179, %v192
    %v194 = vcombine.high %v186, %v186
    %v195 = vcombine.high %v193, %v193
    %v196 = vcombine.high %v47, %v47
    %v198 = vunpack.c.l.s4 1983009808
    %v199 = vunpack.c.0.s8 %v198
    %v200 = vlaneseq
    %v201 = vshrl.u32 %v200, 7
    %v202 = vsub.s32 %v199, %v201
    %v203 = vrot.slane %v47, %v202
    %v205 = vunpack.c.l.s4 1983009808
    %v206 = vunpack.c.0.s8 %v205
    %v207 = vlaneseq
    %v208 = vshrl.u32 %v207, 7
    %v209 = vsub.s32 %v206, %v208
    %v210 = vrot.slane %v196, %v209
    %v211 = vcombine.high %v203, %v203
    %v212 = vcombine.high %v210, %v210
    %221 = vmatprep.subr.mxu0 0.0
    %222 = vmatpush1.msra.mxu0 %v64
    %223 = vmatprep.subr.mxu0 0.0
    %224 = vmatpush1.msra.mxu0 %v63
    %225 = vmatprep.subr.mxu0 0.0
    %226 = vmatpush1.msra.mxu0 %v62
    %227 = vmatprep.subr.mxu0 0.0
    %228 = vmatpush1.msra.mxu0 %v61
    %229 = vmatprep.subr.mxu0 0.0
    %230 = vmatpush1.msra.mxu0 %v60
    %231 = vmatprep.subr.mxu0 0.0
    %232 = vmatpush1.msra.mxu0 %v59
    %233 = vmatprep.subr.mxu0 0.0
    %234 = vmatpush1.msra.mxu0 %v58
    %235 = vmatprep.subr.mxu0 0.0
    %236 = vmatpush1.msra.mxu0 %v57
    %237 = vmatprep.subr.mxu0 0.0
    %238 = vmatpush1.msra.mxu0 %v56
    %239 = vmatprep.subr.mxu0 0.0
    %240 = vmatpush1.msra.mxu0 %v55
    %241 = vmatprep.subr.mxu0 0.0
    %242 = vmatpush1.msra.mxu0 %v54
    %243 = vmatprep.subr.mxu0 0.0
    %244 = vmatpush1.msra.mxu0 %v53
    %245 = vmatprep.subr.mxu0 0.0
    %246 = vmatpush1.msra.mxu0 %v52
    %247 = vmatprep.subr.mxu0 0.0
    %248 = vmatpush1.msra.mxu0 %v51
    %249 = vmatprep.subr.mxu0 0.0
    %250 = vmatpush1.msra.mxu0 %v50
    %251 = vmatprep.subr.mxu0 0.0
    %252 = vmatpush1.msra.mxu0 %v49
    %253 = vmatprep.subr.mxu0 0.0
    %254 = vmatpush2.msra.mxu0 %v80
    %255 = vmatprep.subr.mxu0 0.0
    %256 = vmatpush2.msra.mxu0 %v79
    %257 = vmatprep.subr.mxu0 0.0
    %258 = vmatpush2.msra.mxu0 %v78
    %259 = vmatprep.subr.mxu0 0.0
    %260 = vmatpush2.msra.mxu0 %v77
    %261 = vmatprep.subr.mxu0 0.0
    %262 = vmatpush2.msra.mxu0 %v76
    %263 = vmatprep.subr.mxu0 0.0
    %264 = vmatpush2.msra.mxu0 %v75
    %265 = vmatprep.subr.mxu0 0.0
    %266 = vmatpush2.msra.mxu0 %v74
    %267 = vmatprep.subr.mxu0 0.0
    %268 = vmatpush2.msra.mxu0 %v73
    %269 = vmatprep.subr.mxu0 0.0
    %270 = vmatpush2.msra.mxu0 %v72
    %271 = vmatprep.subr.mxu0 0.0
    %272 = vmatpush2.msra.mxu0 %v71
    %273 = vmatprep.subr.mxu0 0.0
    %274 = vmatpush2.msra.mxu0 %v70
    %275 = vmatprep.subr.mxu0 0.0
    %276 = vmatpush2.msra.mxu0 %v69
    %277 = vmatprep.subr.mxu0 0.0
    %278 = vmatpush2.msra.mxu0 %v68
    %279 = vmatprep.subr.mxu0 0.0
    %280 = vmatpush2.msra.mxu0 %v67
    %281 = vmatprep.subr.mxu0 0.0
    %282 = vmatpush2.msra.mxu0 %v66
    %283 = vmatprep.subr.mxu0 0.0
    %284 = vmatpush2.msra.mxu0 %v65
    %285 = vmatprep.mubr.f32.mxu0 %v194
    %286 = vmatmul.mubr.f32.gmra.mxu0 %v186
    %v287 = vpop.f32.mrf.mxu0
    %v288 = vadd.f32 0.0, %v287
    %v289 = vpop.f32.mrf.mxu0
    %290 = vdwg.mxu0
    %291 = vmatprep.subr.mxu0 0.0
    %292 = vmatpush1.msra.mxu0 %v96
    %293 = vmatprep.subr.mxu0 0.0
    %294 = vmatpush1.msra.mxu0 %v95
    %295 = vmatprep.subr.mxu0 0.0
    %296 = vmatpush1.msra.mxu0 %v94
    %297 = vmatprep.subr.mxu0 0.0
    %298 = vmatpush1.msra.mxu0 %v93
    %299 = vmatprep.subr.mxu0 0.0
    %300 = vmatpush1.msra.mxu0 %v92
    %301 = vmatprep.subr.mxu0 0.0
    %302 = vmatpush1.msra.mxu0 %v91
    %303 = vmatprep.subr.mxu0 0.0
    %304 = vmatpush1.msra.mxu0 %v90
    %305 = vmatprep.subr.mxu0 0.0
    %306 = vmatpush1.msra.mxu0 %v89
    %307 = vmatprep.subr.mxu0 0.0
    %308 = vmatpush1.msra.mxu0 %v88
    %309 = vmatprep.subr.mxu0 0.0
    %310 = vmatpush1.msra.mxu0 %v87
    %311 = vmatprep.subr.mxu0 0.0
    %312 = vmatpush1.msra.mxu0 %v86
    %313 = vmatprep.subr.mxu0 0.0
    %314 = vmatpush1.msra.mxu0 %v85
    %315 = vmatprep.subr.mxu0 0.0
    %316 = vmatpush1.msra.mxu0 %v84
    %317 = vmatprep.subr.mxu0 0.0
    %318 = vmatpush1.msra.mxu0 %v83
    %319 = vmatprep.subr.mxu0 0.0
    %320 = vmatpush1.msra.mxu0 %v82
    %321 = vmatprep.subr.mxu0 0.0
    %322 = vmatpush1.msra.mxu0 %v81
    %323 = vmatprep.subr.mxu0 0.0
    %324 = vmatpush2.msra.mxu0 %v112
    %325 = vmatprep.subr.mxu0 0.0
    %326 = vmatpush2.msra.mxu0 %v111
    %327 = vmatprep.subr.mxu0 0.0
    %328 = vmatpush2.msra.mxu0 %v110
    %329 = vmatprep.subr.mxu0 0.0
    %330 = vmatpush2.msra.mxu0 %v109
    %331 = vmatprep.subr.mxu0 0.0
    %332 = vmatpush2.msra.mxu0 %v108
    %333 = vmatprep.subr.mxu0 0.0
    %334 = vmatpush2.msra.mxu0 %v107
    %335 = vmatprep.subr.mxu0 0.0
    %336 = vmatpush2.msra.mxu0 %v106
    %337 = vmatprep.subr.mxu0 0.0
    %338 = vmatpush2.msra.mxu0 %v105
    %339 = vmatprep.subr.mxu0 0.0
    %340 = vmatpush2.msra.mxu0 %v104
    %341 = vmatprep.subr.mxu0 0.0
    %342 = vmatpush2.msra.mxu0 %v103
    %343 = vmatprep.subr.mxu0 0.0
    %344 = vmatpush2.msra.mxu0 %v102
    %345 = vmatprep.subr.mxu0 0.0
    %346 = vmatpush2.msra.mxu0 %v101
    %347 = vmatprep.subr.mxu0 0.0
    %348 = vmatpush2.msra.mxu0 %v100
    %349 = vmatprep.subr.mxu0 0.0
    %350 = vmatpush2.msra.mxu0 %v99
    %351 = vmatprep.subr.mxu0 0.0
    %352 = vmatpush2.msra.mxu0 %v98
    %353 = vmatprep.subr.mxu0 0.0
    %354 = vmatpush2.msra.mxu0 %v97
    %355 = vmatprep.mubr.f32.mxu0 %v195
    %356 = vmatmul.mubr.f32.gmra.mxu0 %v193
    %v357 = vpop.f32.mrf.mxu0
    %v358 = vadd.f32 %v288, %v357
    %v359 = vpop.f32.mrf.mxu0
    %360 = vdwg.mxu0
    %361 = vmatprep.subr.mxu0 0.0
    %362 = vmatpush1.msra.mxu0 %v128
    %363 = vmatprep.subr.mxu0 0.0
    %364 = vmatpush1.msra.mxu0 %v127
    %365 = vmatprep.subr.mxu0 0.0
    %366 = vmatpush1.msra.mxu0 %v126
    %367 = vmatprep.subr.mxu0 0.0
    %368 = vmatpush1.msra.mxu0 %v125
    %369 = vmatprep.subr.mxu0 0.0
    %370 = vmatpush1.msra.mxu0 %v124
    %371 = vmatprep.subr.mxu0 0.0
    %372 = vmatpush1.msra.mxu0 %v123
    %373 = vmatprep.subr.mxu0 0.0
    %374 = vmatpush1.msra.mxu0 %v122
    %375 = vmatprep.subr.mxu0 0.0
    %376 = vmatpush1.msra.mxu0 %v121
    %377 = vmatprep.subr.mxu0 0.0
    %378 = vmatpush1.msra.mxu0 %v120
    %379 = vmatprep.subr.mxu0 0.0
    %380 = vmatpush1.msra.mxu0 %v119
    %381 = vmatprep.subr.mxu0 0.0
    %382 = vmatpush1.msra.mxu0 %v118
    %383 = vmatprep.subr.mxu0 0.0
    %384 = vmatpush1.msra.mxu0 %v117
    %385 = vmatprep.subr.mxu0 0.0
    %386 = vmatpush1.msra.mxu0 %v116
    %387 = vmatprep.subr.mxu0 0.0
    %388 = vmatpush1.msra.mxu0 %v115
    %389 = vmatprep.subr.mxu0 0.0
    %390 = vmatpush1.msra.mxu0 %v114
    %391 = vmatprep.subr.mxu0 0.0
    %392 = vmatpush1.msra.mxu0 %v113
    %393 = vmatprep.subr.mxu0 0.0
    %394 = vmatpush2.msra.mxu0 %v144
    %395 = vmatprep.subr.mxu0 0.0
    %396 = vmatpush2.msra.mxu0 %v143
    %397 = vmatprep.subr.mxu0 0.0
    %398 = vmatpush2.msra.mxu0 %v142
    %399 = vmatprep.subr.mxu0 0.0
    %400 = vmatpush2.msra.mxu0 %v141
    %401 = vmatprep.subr.mxu0 0.0
    %402 = vmatpush2.msra.mxu0 %v140
    %403 = vmatprep.subr.mxu0 0.0
    %404 = vmatpush2.msra.mxu0 %v139
    %405 = vmatprep.subr.mxu0 0.0
    %406 = vmatpush2.msra.mxu0 %v138
    %407 = vmatprep.subr.mxu0 0.0
    %408 = vmatpush2.msra.mxu0 %v137
    %409 = vmatprep.subr.mxu0 0.0
    %410 = vmatpush2.msra.mxu0 %v136
    %411 = vmatprep.subr.mxu0 0.0
    %412 = vmatpush2.msra.mxu0 %v135
    %413 = vmatprep.subr.mxu0 0.0
    %414 = vmatpush2.msra.mxu0 %v134
    %415 = vmatprep.subr.mxu0 0.0
    %416 = vmatpush2.msra.mxu0 %v133
    %417 = vmatprep.subr.mxu0 0.0
    %418 = vmatpush2.msra.mxu0 %v132
    %419 = vmatprep.subr.mxu0 0.0
    %420 = vmatpush2.msra.mxu0 %v131
    %421 = vmatprep.subr.mxu0 0.0
    %422 = vmatpush2.msra.mxu0 %v130
    %423 = vmatprep.subr.mxu0 0.0
    %424 = vmatpush2.msra.mxu0 %v129
    %425 = vmatprep.mubr.f32.mxu0 %v211
    %426 = vmatmul.mubr.f32.gmra.mxu0 %v203
    %v427 = vpop.f32.mrf.mxu0
    %v428 = vadd.f32 %v358, %v427
    %v429 = vpop.f32.mrf.mxu0
    %430 = vdwg.mxu0
    %431 = vmatprep.subr.mxu0 0.0
    %432 = vmatpush1.msra.mxu0 %v160
    %433 = vmatprep.subr.mxu0 0.0
    %434 = vmatpush1.msra.mxu0 %v159
    %435 = vmatprep.subr.mxu0 0.0
    %436 = vmatpush1.msra.mxu0 %v158
    %437 = vmatprep.subr.mxu0 0.0
    %438 = vmatpush1.msra.mxu0 %v157
    %439 = vmatprep.subr.mxu0 0.0
    %440 = vmatpush1.msra.mxu0 %v156
    %441 = vmatprep.subr.mxu0 0.0
    %442 = vmatpush1.msra.mxu0 %v155
    %443 = vmatprep.subr.mxu0 0.0
    %444 = vmatpush1.msra.mxu0 %v154
    %445 = vmatprep.subr.mxu0 0.0
    %446 = vmatpush1.msra.mxu0 %v153
    %447 = vmatprep.subr.mxu0 0.0
    %448 = vmatpush1.msra.mxu0 %v152
    %449 = vmatprep.subr.mxu0 0.0
    %450 = vmatpush1.msra.mxu0 %v151
    %451 = vmatprep.subr.mxu0 0.0
    %452 = vmatpush1.msra.mxu0 %v150
    %453 = vmatprep.subr.mxu0 0.0
    %454 = vmatpush1.msra.mxu0 %v149
    %455 = vmatprep.subr.mxu0 0.0
    %456 = vmatpush1.msra.mxu0 %v148
    %457 = vmatprep.subr.mxu0 0.0
    %458 = vmatpush1.msra.mxu0 %v147
    %459 = vmatprep.subr.mxu0 0.0
    %460 = vmatpush1.msra.mxu0 %v146
    %461 = vmatprep.subr.mxu0 0.0
    %462 = vmatpush1.msra.mxu0 %v145
    %463 = vmatprep.subr.mxu0 0.0
    %464 = vmatpush2.msra.mxu0 %v176
    %465 = vmatprep.subr.mxu0 0.0
    %466 = vmatpush2.msra.mxu0 %v175
    %467 = vmatprep.subr.mxu0 0.0
    %468 = vmatpush2.msra.mxu0 %v174
    %469 = vmatprep.subr.mxu0 0.0
    %470 = vmatpush2.msra.mxu0 %v173
    %471 = vmatprep.subr.mxu0 0.0
    %472 = vmatpush2.msra.mxu0 %v172
    %473 = vmatprep.subr.mxu0 0.0
    %474 = vmatpush2.msra.mxu0 %v171
    %475 = vmatprep.subr.mxu0 0.0
    %476 = vmatpush2.msra.mxu0 %v170
    %477 = vmatprep.subr.mxu0 0.0
    %478 = vmatpush2.msra.mxu0 %v169
    %479 = vmatprep.subr.mxu0 0.0
    %480 = vmatpush2.msra.mxu0 %v168
    %481 = vmatprep.subr.mxu0 0.0
    %482 = vmatpush2.msra.mxu0 %v167
    %483 = vmatprep.subr.mxu0 0.0
    %484 = vmatpush2.msra.mxu0 %v166
    %485 = vmatprep.subr.mxu0 0.0
    %486 = vmatpush2.msra.mxu0 %v165
    %487 = vmatprep.subr.mxu0 0.0
    %488 = vmatpush2.msra.mxu0 %v164
    %489 = vmatprep.subr.mxu0 0.0
    %490 = vmatpush2.msra.mxu0 %v163
    %491 = vmatprep.subr.mxu0 0.0
    %492 = vmatpush2.msra.mxu0 %v162
    %493 = vmatprep.subr.mxu0 0.0
    %494 = vmatpush2.msra.mxu0 %v161
    %495 = vmatprep.mubr.f32.mxu0 %v212
    %496 = vmatmul.mubr.f32.gmra.mxu0 %v210
    %v497 = vpop.f32.mrf.mxu0
    %v498 = vadd.f32 %v428, %v497
    %v499 = vpop.f32.mrf.mxu0
    %500 = vdwg.mxu0
    %v501 = vadd.f32 %v48, %v498
    %502 = vst [vmem:[#allocation2] sm:$0x3] %v501
    // Predicated region
    $region26: #{tpu_custom_call.1} parent=1 // pred_check
      %p503 = pneg %p41
    $region27: #{tpu_custom_call.1} parent=1 // pred_check_branch
      %505 = sbr.rel (%p503) target = $region29
    $region28: #{tpu_custom_call.1} parent=1 // pred_region
      %v506 = vld [vmem:[#allocation2] sm:$0x3]
      %v507 = vld [vmem:[%s2] sm:$0x1]
      %v509 = vlaneseq
      %v510 = vshrl.u32 %v509, 7
      %v511 = vsub.s32 0, %v510
      %v512 = vrot.slane %v507, %v511
      %v514 = vadd.f32 %v506, %v512
      %515 = vst [vmem:[#allocation8] sm:$0x3] %v514
    $region29: #{tpu_custom_call.1} parent=1 // pred_fallthru
      _
    // Predicated region
    $region30: #{tpu_custom_call.1} parent=1 // pred_check
      _
    $region31: #{tpu_custom_call.1} parent=1 // pred_check_branch
      %517 = sbr.rel (0) target = $region33
    $region32: #{tpu_custom_call.1} parent=1 // pred_region
      %s519 = ssub.s32 32, 32
      %520 = vsyncadd [#allocation5], %s519
      %s522 = sshll.u32 [#allocation8], 4
      %s523 = int_to_ptr.vmem [resolvable:$true] %s522
      %525 = dma.vmem_to_hbm [thread:$0]  %s523, 32, %s3, [#allocation5]
    $region33: #{tpu_custom_call.1} parent=1 // pred_fallthru
      _
    // Predicated region
    $region34: #{tpu_custom_call.1} parent=1 // pred_check
      _
    $region35: #{tpu_custom_call.1} parent=1 // pred_check_branch
      %527 = sbr.rel (0) target = $region37
    $region36: #{tpu_custom_call.1} parent=1 // pred_region
      %528 = dma.done [#allocation5], 32
    $region37: #{tpu_custom_call.1} parent=1 // pred_fallthru
      _
    %529 = vsyncpa [#allocation4], 1
    %530 = vsyncpa [#allocation7], 1
    %531 = vsyncpa [#allocation5], 1

</llo_original>
